<compile_context>
chip_gen: v5e
topology: v5e:2x2
jax: 0.10.0
libtpu: 0.0.40
codegen_flags: <defaults>
</compile_context>

<pallas_src>
import functools

import jax
import jax.numpy as jnp
from jax.experimental import pallas as pl
from jax.experimental.pallas import tpu as pltpu


def _resblock_kernel(x_ref, w1_ref, b1_ref, w2_ref, b2_ref, o_ref,
                     xpad_ref, hpad_ref, *, ksize, res_scale):
    """Fused conv1 -> ReLU -> conv2 -> (*res_scale) -> (+x), one batch element.

    x_ref  : [1, H, W*C]  f32  (lane-dense flattened rows)
    w*_ref : [ksize, W*C, W*C] bf16 block-banded row operators
    b*_ref : [1, W*C]     f32  (bias broadcast over W)
    o_ref  : [1, H, W*C]
    *pad_ref: [H + 2*pad, W*C] f32 VMEM scratch (H-direction halo only).
    """
    H = x_ref.shape[1]
    WC = x_ref.shape[2]
    pad = ksize // 2

    def conv(pad_ref, w_ref, b_ref, rows_f32):
        # Zero the halo rows and write the interior (re-done every grid step,
        # so it is safe if the parallel grid is sharded across TensorCores).
        if pad > 0:
            zero_rows = jnp.zeros((pad, WC), pad_ref.dtype)
            pad_ref[0:pad, :] = zero_rows
            pad_ref[pad + H:pad + H + pad, :] = zero_rows
        pad_ref[pad:pad + H, :] = rows_f32.astype(pad_ref.dtype)
        acc = jnp.zeros((H, WC), jnp.float32)
        for kh in range(ksize):                       # ksize row-matmuls, K=W*C
            lhs = pad_ref[kh:kh + H, :].astype(jnp.bfloat16)
            acc = acc + jnp.dot(lhs, w_ref[kh],
                                preferred_element_type=jnp.float32)
        return acc + b_ref[...]                       # f32 epilogue (bias)

    x = x_ref[0]                                               # [H, W*C] f32
    h = jnp.maximum(conv(xpad_ref, w1_ref, b1_ref, x), 0.0)    # conv1 + ReLU
    y = conv(hpad_ref, w2_ref, b2_ref, h)                      # conv2
    if res_scale != 1.0:                                       # static skip
        y = y * res_scale
    o_ref[...] = (y + x)[None].astype(o_ref.dtype)             # residual add


def _build_row_operator(w, width):
    """Fold kw taps + horizontal zero padding of a conv weight into row ops.

    w     : [Cout, Cin, KH, KW]  (PyTorch Conv2d layout)
    return: [KH, W*Cin, W*Cout]  bf16; operator[kh] maps a flattened padded
            input row (index j*Cin + ci) to a flattened output row
            (index j*Cout + co) for vertical tap kh.
    """
    cout, cin, KH, KW = w.shape
    pad = KW // 2
    wt = jnp.transpose(w, (2, 3, 1, 0)).astype(jnp.float32)    # [KH,KW,Cin,Cout]
    js = jnp.arange(width)[:, None]      # source column block j'
    jd = jnp.arange(width)[None, :]      # destination column block j
    ops = []
    for kh in range(KH):
        op = jnp.zeros((width * cin, width * cout), jnp.float32)
        for kw in range(KW):
            sel = (js - jd == (kw - pad)).astype(jnp.float32)  # [W, W] band
            op = op + jnp.kron(sel, wt[kh, kw])
        ops.append(op)
    return jnp.stack(ops).astype(jnp.bfloat16)


def resblock_forward(x_nchw, w1, b1, w2, b2, kernel_size=3, res_scale=1.0):
    """Pallas ResBlock forward.

    x_nchw : [N, C, H, W]        (PyTorch layout)
    w1, w2 : [Cout, Cin, KH, KW] (PyTorch Conv2d weight layout), Cout == Cin
    b1, b2 : [Cout]
    """
    N, C, H, W = x_nchw.shape
    pad = kernel_size // 2
    WC = W * C

    # NCHW -> lane-dense flattened rows [N, H, W*C]
    x = jnp.transpose(x_nchw, (0, 2, 3, 1)).reshape(N, H, WC)

    w1op = _build_row_operator(w1, W)
    w2op = _build_row_operator(w2, W)
    b1r = jnp.tile(b1.astype(jnp.float32), W).reshape(1, WC)
    b2r = jnp.tile(b2.astype(jnp.float32), W).reshape(1, WC)

    kernel = functools.partial(_resblock_kernel, ksize=kernel_size,
                               res_scale=float(res_scale))

    out = pl.pallas_call(
        kernel,
        out_shape=jax.ShapeDtypeStruct((N, H, WC), x.dtype),
        grid=(N,),
        in_specs=[
            pl.BlockSpec((1, H, WC), lambda n: (n, 0, 0)),            # x
            pl.BlockSpec((kernel_size, WC, WC), lambda n: (0, 0, 0)),  # w1 (resident)
            pl.BlockSpec((1, WC), lambda n: (0, 0)),                   # b1
            pl.BlockSpec((kernel_size, WC, WC), lambda n: (0, 0, 0)),  # w2 (resident)
            pl.BlockSpec((1, WC), lambda n: (0, 0)),                   # b2
        ],
        out_specs=pl.BlockSpec((1, H, WC), lambda n: (n, 0, 0)),
        scratch_shapes=[
            pltpu.VMEM((H + 2 * pad, WC), jnp.float32),   # padded x rows
            pltpu.VMEM((H + 2 * pad, WC), jnp.float32),   # padded h rows
        ],
        compiler_params=pltpu.CompilerParams(
            dimension_semantics=("parallel",)),
    )(x, w1op, b1r, w2op, b2r)

    # [N, H, W*C] -> NCHW
    return jnp.transpose(out.reshape(N, H, W, C), (0, 3, 1, 2))


def _reference_forward(x_nchw, w1, b1, w2, b2, kernel_size=3, res_scale=1.0):
    """Pure-JAX f32 reference (lax conv) for correctness checking."""
    def conv(x, w, b):
        y = jax.lax.conv_general_dilated(
            x, w, window_strides=(1, 1), padding="SAME",
            dimension_numbers=("NCHW", "OIHW", "NCHW"))
        return y + b.reshape(1, -1, 1, 1)

    h = jax.nn.relu(conv(x_nchw, w1, b1))
    return conv(h, w2, b2) * res_scale + x_nchw


if __name__ == "__main__":
    # small, module-consistent shapes (W * n_feats = 128 -> fully lane-dense)
    batch, n_feats, spatial, kernel_size = 2, 8, 16, 3
    res_scale = 1.0

    key = jax.random.PRNGKey(0)
    kx, kw1, kb1, kw2, kb2 = jax.random.split(key, 5)

    x = jax.random.normal(kx, (batch, n_feats, spatial, spatial), jnp.float32)
    w1 = jax.random.normal(kw1, (n_feats, n_feats, kernel_size, kernel_size),
                           jnp.float32) * 0.1
    b1 = jax.random.normal(kb1, (n_feats,), jnp.float32) * 0.1
    w2 = jax.random.normal(kw2, (n_feats, n_feats, kernel_size, kernel_size),
                           jnp.float32) * 0.1
    b2 = jax.random.normal(kb2, (n_feats,), jnp.float32) * 0.1

    fwd = jax.jit(functools.partial(resblock_forward,
                                    kernel_size=kernel_size,
                                    res_scale=res_scale))
    out = jax.block_until_ready(fwd(x, w1, b1, w2, b2))

    ref = _reference_forward(x, w1, b1, w2, b2,
                             kernel_size=kernel_size, res_scale=res_scale)
    assert out.shape == x.shape and out.dtype == x.dtype
    # bf16 MXU operands -> looser tolerance than a pure-f32 path
    assert jnp.allclose(out, ref, atol=5e-2, rtol=5e-2), "mismatch vs reference"

    print("KERNEL_OK")
</pallas_src>

<mosaic_0001>
module attributes {stable_mosaic.version = 11 : i64} {
  func.func @_resblock_kernel(%arg0: i32, %arg1: memref<1x16x128xf32, #tpu.memory_space<vmem>>, %arg2: memref<3x128x128xbf16, #tpu.memory_space<vmem>>, %arg3: memref<1x128xf32, #tpu.memory_space<vmem>>, %arg4: memref<3x128x128xbf16, #tpu.memory_space<vmem>>, %arg5: memref<1x128xf32, #tpu.memory_space<vmem>>, %arg6: memref<1x16x128xf32, #tpu.memory_space<vmem>>, %arg7: memref<18x128xf32, #tpu.memory_space<vmem>>, %arg8: memref<18x128xf32, #tpu.memory_space<vmem>>) attributes {dimension_semantics = [#tpu.dimension_semantics<parallel>], iteration_bounds = array<i64: 2>, scalar_prefetch = 0 : i64, scratch_operands = 2 : i64, tpu.core_type = #tpu.core_type<tc>, window_params = [{transform_indices = @transform_0, window_bounds = array<i64: 1, 16, 128>}, {pipeline_mode = #tpu.pipeline_mode<synchronous>, transform_indices = @transform_1, window_bounds = array<i64: 3, 128, 128>}, {pipeline_mode = #tpu.pipeline_mode<synchronous>, transform_indices = @transform_2, window_bounds = array<i64: 1, 128>}, {pipeline_mode = #tpu.pipeline_mode<synchronous>, transform_indices = @transform_3, window_bounds = array<i64: 3, 128, 128>}, {pipeline_mode = #tpu.pipeline_mode<synchronous>, transform_indices = @transform_4, window_bounds = array<i64: 1, 128>}, {transform_indices = @transform_5, window_bounds = array<i64: 1, 16, 128>}]} {
    %c0 = arith.constant 0 : index
    %c0_0 = arith.constant 0 : index
    %c0_1 = arith.constant 0 : index
    %0 = vector.load %arg1[%c0, %c0_0, %c0_1] : memref<1x16x128xf32, #tpu.memory_space<vmem>>, vector<1x16x128xf32>
    %1 = vector.shape_cast %0 : vector<1x16x128xf32> to vector<16x128xf32>
    %cst = arith.constant 0.000000e+00 : f32
    %2 = vector.broadcast %cst : f32 to vector<1x128xf32>
    %c0_2 = arith.constant 0 : index
    %c0_3 = arith.constant 0 : index
    %3 = vector.load %arg7[%c0_2, %c0_3] : memref<18x128xf32, #tpu.memory_space<vmem>>, vector<1x128xf32>
    tpu.vector_store %arg7[%c0_2, %c0_3], %2 {strides = array<i32>} : memref<18x128xf32, #tpu.memory_space<vmem>>, vector<1x128xf32>,
    %c17 = arith.constant 17 : index
    %c0_4 = arith.constant 0 : index
    %4 = vector.load %arg7[%c17, %c0_4] : memref<18x128xf32, #tpu.memory_space<vmem>>, vector<1x128xf32>
    tpu.vector_store %arg7[%c17, %c0_4], %2 {strides = array<i32>} : memref<18x128xf32, #tpu.memory_space<vmem>>, vector<1x128xf32>,
    %c1 = arith.constant 1 : index
    %c0_5 = arith.constant 0 : index
    %5 = vector.load %arg7[%c1, %c0_5] : memref<18x128xf32, #tpu.memory_space<vmem>>, vector<16x128xf32>
    tpu.vector_store %arg7[%c1, %c0_5], %1 {strides = array<i32>} : memref<18x128xf32, #tpu.memory_space<vmem>>, vector<16x128xf32>,
    %cst_6 = arith.constant 0.000000e+00 : f32
    %6 = vector.broadcast %cst_6 : f32 to vector<16x128xf32>
    %c0_7 = arith.constant 0 : index
    %c0_8 = arith.constant 0 : index
    %7 = vector.load %arg7[%c0_7, %c0_8] : memref<18x128xf32, #tpu.memory_space<vmem>>, vector<16x128xf32>
    %8 = arith.truncf %7 : vector<16x128xf32> to vector<16x128xbf16>
    %c0_9 = arith.constant 0 : index
    %c0_10 = arith.constant 0 : index
    %c0_11 = arith.constant 0 : index
    %9 = vector.load %arg2[%c0_9, %c0_10, %c0_11] : memref<3x128x128xbf16, #tpu.memory_space<vmem>>, vector<1x128x128xbf16>
    %10 = vector.shape_cast %9 : vector<1x128x128xbf16> to vector<128x128xbf16>
    %cst_12 = arith.constant dense<0.000000e+00> : vector<16x128xf32>
    %11 = tpu.matmul %8, %10, %cst_12 {dimension_numbers = #tpu.dot_dimension_numbers<[1], [0], [0], [1], [0, 0, 1, 1], [], []>} : vector<16x128xbf16>, vector<128x128xbf16>, vector<16x128xf32> -> vector<16x128xf32>
    %12 = arith.addf %6, %11 : vector<16x128xf32>
    %c1_13 = arith.constant 1 : index
    %c0_14 = arith.constant 0 : index
    %13 = vector.load %arg7[%c1_13, %c0_14] : memref<18x128xf32, #tpu.memory_space<vmem>>, vector<16x128xf32>
    %14 = arith.truncf %13 : vector<16x128xf32> to vector<16x128xbf16>
    %c1_15 = arith.constant 1 : index
    %c0_16 = arith.constant 0 : index
    %c0_17 = arith.constant 0 : index
    %15 = vector.load %arg2[%c1_15, %c0_16, %c0_17] : memref<3x128x128xbf16, #tpu.memory_space<vmem>>, vector<1x128x128xbf16>
    %16 = vector.shape_cast %15 : vector<1x128x128xbf16> to vector<128x128xbf16>
    %cst_18 = arith.constant dense<0.000000e+00> : vector<16x128xf32>
    %17 = tpu.matmul %14, %16, %cst_18 {dimension_numbers = #tpu.dot_dimension_numbers<[1], [0], [0], [1], [0, 0, 1, 1], [], []>} : vector<16x128xbf16>, vector<128x128xbf16>, vector<16x128xf32> -> vector<16x128xf32>
    %18 = arith.addf %12, %17 : vector<16x128xf32>
    %c2 = arith.constant 2 : index
    %c0_19 = arith.constant 0 : index
    %19 = vector.load %arg7[%c2, %c0_19] : memref<18x128xf32, #tpu.memory_space<vmem>>, vector<16x128xf32>
    %20 = arith.truncf %19 : vector<16x128xf32> to vector<16x128xbf16>
    %c2_20 = arith.constant 2 : index
    %c0_21 = arith.constant 0 : index
    %c0_22 = arith.constant 0 : index
    %21 = vector.load %arg2[%c2_20, %c0_21, %c0_22] : memref<3x128x128xbf16, #tpu.memory_space<vmem>>, vector<1x128x128xbf16>
    %22 = vector.shape_cast %21 : vector<1x128x128xbf16> to vector<128x128xbf16>
    %cst_23 = arith.constant dense<0.000000e+00> : vector<16x128xf32>
    %23 = tpu.matmul %20, %22, %cst_23 {dimension_numbers = #tpu.dot_dimension_numbers<[1], [0], [0], [1], [0, 0, 1, 1], [], []>} : vector<16x128xbf16>, vector<128x128xbf16>, vector<16x128xf32> -> vector<16x128xf32>
    %24 = arith.addf %18, %23 : vector<16x128xf32>
    %c0_24 = arith.constant 0 : index
    %c0_25 = arith.constant 0 : index
    %25 = vector.load %arg3[%c0_24, %c0_25] : memref<1x128xf32, #tpu.memory_space<vmem>>, vector<1x128xf32>
    %26 = vector.broadcast %25 : vector<1x128xf32> to vector<16x128xf32>
    %27 = arith.addf %24, %26 : vector<16x128xf32>
    %cst_26 = arith.constant 0.000000e+00 : f32
    %28 = vector.broadcast %cst_26 : f32 to vector<16x128xf32>
    %29 = arith.maximumf %27, %28 : vector<16x128xf32>
    %cst_27 = arith.constant 0.000000e+00 : f32
    %30 = vector.broadcast %cst_27 : f32 to vector<1x128xf32>
    %c0_28 = arith.constant 0 : index
    %c0_29 = arith.constant 0 : index
    %31 = vector.load %arg8[%c0_28, %c0_29] : memref<18x128xf32, #tpu.memory_space<vmem>>, vector<1x128xf32>
    tpu.vector_store %arg8[%c0_28, %c0_29], %30 {strides = array<i32>} : memref<18x128xf32, #tpu.memory_space<vmem>>, vector<1x128xf32>,
    %c17_30 = arith.constant 17 : index
    %c0_31 = arith.constant 0 : index
    %32 = vector.load %arg8[%c17_30, %c0_31] : memref<18x128xf32, #tpu.memory_space<vmem>>, vector<1x128xf32>
    tpu.vector_store %arg8[%c17_30, %c0_31], %30 {strides = array<i32>} : memref<18x128xf32, #tpu.memory_space<vmem>>, vector<1x128xf32>,
    %c1_32 = arith.constant 1 : index
    %c0_33 = arith.constant 0 : index
    %33 = vector.load %arg8[%c1_32, %c0_33] : memref<18x128xf32, #tpu.memory_space<vmem>>, vector<16x128xf32>
    tpu.vector_store %arg8[%c1_32, %c0_33], %29 {strides = array<i32>} : memref<18x128xf32, #tpu.memory_space<vmem>>, vector<16x128xf32>,
    %cst_34 = arith.constant 0.000000e+00 : f32
    %34 = vector.broadcast %cst_34 : f32 to vector<16x128xf32>
    %c0_35 = arith.constant 0 : index
    %c0_36 = arith.constant 0 : index
    %35 = vector.load %arg8[%c0_35, %c0_36] : memref<18x128xf32, #tpu.memory_space<vmem>>, vector<16x128xf32>
    %36 = arith.truncf %35 : vector<16x128xf32> to vector<16x128xbf16>
    %c0_37 = arith.constant 0 : index
    %c0_38 = arith.constant 0 : index
    %c0_39 = arith.constant 0 : index
    %37 = vector.load %arg4[%c0_37, %c0_38, %c0_39] : memref<3x128x128xbf16, #tpu.memory_space<vmem>>, vector<1x128x128xbf16>
    %38 = vector.shape_cast %37 : vector<1x128x128xbf16> to vector<128x128xbf16>
    %cst_40 = arith.constant dense<0.000000e+00> : vector<16x128xf32>
    %39 = tpu.matmul %36, %38, %cst_40 {dimension_numbers = #tpu.dot_dimension_numbers<[1], [0], [0], [1], [0, 0, 1, 1], [], []>} : vector<16x128xbf16>, vector<128x128xbf16>, vector<16x128xf32> -> vector<16x128xf32>
    %40 = arith.addf %34, %39 : vector<16x128xf32>
    %c1_41 = arith.constant 1 : index
    %c0_42 = arith.constant 0 : index
    %41 = vector.load %arg8[%c1_41, %c0_42] : memref<18x128xf32, #tpu.memory_space<vmem>>, vector<16x128xf32>
    %42 = arith.truncf %41 : vector<16x128xf32> to vector<16x128xbf16>
    %c1_43 = arith.constant 1 : index
    %c0_44 = arith.constant 0 : index
    %c0_45 = arith.constant 0 : index
    %43 = vector.load %arg4[%c1_43, %c0_44, %c0_45] : memref<3x128x128xbf16, #tpu.memory_space<vmem>>, vector<1x128x128xbf16>
    %44 = vector.shape_cast %43 : vector<1x128x128xbf16> to vector<128x128xbf16>
    %cst_46 = arith.constant dense<0.000000e+00> : vector<16x128xf32>
    %45 = tpu.matmul %42, %44, %cst_46 {dimension_numbers = #tpu.dot_dimension_numbers<[1], [0], [0], [1], [0, 0, 1, 1], [], []>} : vector<16x128xbf16>, vector<128x128xbf16>, vector<16x128xf32> -> vector<16x128xf32>
    %46 = arith.addf %40, %45 : vector<16x128xf32>
    %c2_47 = arith.constant 2 : index
    %c0_48 = arith.constant 0 : index
    %47 = vector.load %arg8[%c2_47, %c0_48] : memref<18x128xf32, #tpu.memory_space<vmem>>, vector<16x128xf32>
    %48 = arith.truncf %47 : vector<16x128xf32> to vector<16x128xbf16>
    %c2_49 = arith.constant 2 : index
    %c0_50 = arith.constant 0 : index
    %c0_51 = arith.constant 0 : index
    %49 = vector.load %arg4[%c2_49, %c0_50, %c0_51] : memref<3x128x128xbf16, #tpu.memory_space<vmem>>, vector<1x128x128xbf16>
    %50 = vector.shape_cast %49 : vector<1x128x128xbf16> to vector<128x128xbf16>
    %cst_52 = arith.constant dense<0.000000e+00> : vector<16x128xf32>
    %51 = tpu.matmul %48, %50, %cst_52 {dimension_numbers = #tpu.dot_dimension_numbers<[1], [0], [0], [1], [0, 0, 1, 1], [], []>} : vector<16x128xbf16>, vector<128x128xbf16>, vector<16x128xf32> -> vector<16x128xf32>
    %52 = arith.addf %46, %51 : vector<16x128xf32>
    %c0_53 = arith.constant 0 : index
    %c0_54 = arith.constant 0 : index
    %53 = vector.load %arg5[%c0_53, %c0_54] : memref<1x128xf32, #tpu.memory_space<vmem>>, vector<1x128xf32>
    %54 = vector.broadcast %53 : vector<1x128xf32> to vector<16x128xf32>
    %55 = arith.addf %52, %54 : vector<16x128xf32>
    %56 = arith.addf %55, %1 : vector<16x128xf32>
    %57 = vector.shape_cast %56 : vector<16x128xf32> to vector<1x16x128xf32>
    %c0_55 = arith.constant 0 : index
    %c0_56 = arith.constant 0 : index
    %c0_57 = arith.constant 0 : index
    %58 = vector.load %arg6[%c0_55, %c0_56, %c0_57] : memref<1x16x128xf32, #tpu.memory_space<vmem>>, vector<1x16x128xf32>
    tpu.vector_store %arg6[%c0_55, %c0_56, %c0_57], %57 {strides = array<i32>} : memref<1x16x128xf32, #tpu.memory_space<vmem>>, vector<1x16x128xf32>,
    return
  }
  func.func @transform_0(%arg0: i32) -> (i32, i32, i32) {
    %c0_i32 = arith.constant 0 : i32
    %c0_i32_0 = arith.constant 0 : i32
    %c0_i32_1 = arith.constant 0 : i32
    return %arg0, %c0_i32, %c0_i32_0 : i32, i32, i32
  }
  func.func @transform_1(%arg0: i32) -> (i32, i32, i32) {
    %c0_i32 = arith.constant 0 : i32
    %c0_i32_0 = arith.constant 0 : i32
    %c0_i32_1 = arith.constant 0 : i32
    %c0_i32_2 = arith.constant 0 : i32
    return %c0_i32, %c0_i32_0, %c0_i32_1 : i32, i32, i32
  }
  func.func @transform_2(%arg0: i32) -> (i32, i32) {
    %c0_i32 = arith.constant 0 : i32
    %c0_i32_0 = arith.constant 0 : i32
    %c0_i32_1 = arith.constant 0 : i32
    return %c0_i32, %c0_i32_0 : i32, i32
  }
  func.func @transform_3(%arg0: i32) -> (i32, i32, i32) {
    %c0_i32 = arith.constant 0 : i32
    %c0_i32_0 = arith.constant 0 : i32
    %c0_i32_1 = arith.constant 0 : i32
    %c0_i32_2 = arith.constant 0 : i32
    return %c0_i32, %c0_i32_0, %c0_i32_1 : i32, i32, i32
  }
  func.func @transform_4(%arg0: i32) -> (i32, i32) {
    %c0_i32 = arith.constant 0 : i32
    %c0_i32_0 = arith.constant 0 : i32
    %c0_i32_1 = arith.constant 0 : i32
    return %c0_i32, %c0_i32_0 : i32, i32
  }
  func.func @transform_5(%arg0: i32) -> (i32, i32, i32) {
    %c0_i32 = arith.constant 0 : i32
    %c0_i32_0 = arith.constant 0 : i32
    %c0_i32_1 = arith.constant 0 : i32
    return %arg0, %c0_i32, %c0_i32_0 : i32, i32, i32
  }
}

</mosaic_0001>

<llo_original>
// kernel: tile.13
$region0: #{tile.13}
  #allocation0 [shape = 's32[1]{0}', space=sflag, size = 0x4, scoped, tag = 'scoped memory for tile.13']
  %s0 = inlined_call_operand.vmem [shape: f32[8], index: 0, kind: input, shape index: {}]
  %s1 = inlined_call_operand.vmem [shape: f32[16,8], index: 1, kind: output, shape index: {}]
  // Predicated region
  $region2: #{tile.13} parent=0 // pred_check
    _
  $region3: #{tile.13} parent=0 // pred_check_branch
    %3 = sbr.rel (0) target = $region5
  $region4: #{tile.13} parent=0 // pred_region
    _
  $region5: #{tile.13} parent=0 // pred_fallthru
    _
  %v4 = vld [vmem:[%s0] ss:$0 sm:$0xff]
  %5 = vst [vmem:[%s1] sm:$0xff] %v4
  %s6 = scalar_lea.vmem %s1, 8
  %7 = vst [vmem:[%s6] sm:$0xff] %v4

// kernel: tile.14
$region0: #{tile.14}
  %s0 = inlined_call_operand.vmem [shape: f32[16,8], index: 0, kind: input, shape index: {}]
  %s1 = inlined_call_operand.vmem [shape: f32[1,128], index: 1, kind: output, shape index: {}]
  $region1: #{tile.14} parent=0
    #allocation0 [shape = 'u8[4096]{0}', space=vmem, size = 0x1000, scoped, tag = 'scoped mem for output reshape']
    %v2 = vld [vmem:[%s0] sm:$0x1]
    %vm3 = vcmask 64512
    %4 = vst.msk [vmem:[#allocation0] sm:$0x1] %vm3, %v2
    %s5 = scalar_lea.vmem %s0, 15
    %v6 = vld [vmem:[%s5] sm:$0x1]
    %7 = vrot.lane.b32.xlu0 %v6, 120
    %v8 = vpop.permute.xlu0 %7
    %vm9 = vcmask 1048512
    %10 = vst.msk [vmem:[#allocation0] sm:$0x1] %vm9, %v8
    %s11 = scalar_lea.vmem %s0, 14
    %v12 = vld [vmem:[%s11] sm:$0x1]
    %13 = vrot.lane.b32.xlu0 %v12, 112
    %v14 = vpop.permute.xlu0 %13
    %vm15 = vcmask 982912
    %16 = vst.msk [vmem:[#allocation0] sm:$0x1] %vm15, %v14
    %s17 = scalar_lea.vmem %s0, 13
    %v18 = vld [vmem:[%s17] sm:$0x1]
    %19 = vrot.lane.b32.xlu0 %v18, 104
    %v20 = vpop.permute.xlu0 %19
    %vm21 = vcmask 917312
    %22 = vst.msk [vmem:[#allocation0] sm:$0x1] %vm21, %v20
    %s23 = scalar_lea.vmem %s0, 12
    %v24 = vld [vmem:[%s23] sm:$0x1]
    %25 = vrot.lane.b32.xlu0 %v24, 96
    %v26 = vpop.permute.xlu0 %25
    %vm27 = vcmask 851712
    %28 = vst.msk [vmem:[#allocation0] sm:$0x1] %vm27, %v26
    %s29 = scalar_lea.vmem %s0, 11
    %v30 = vld [vmem:[%s29] sm:$0x1]
    %31 = vrot.lane.b32.xlu0 %v30, 88
    %v32 = vpop.permute.xlu0 %31
    %vm33 = vcmask 786112
    %34 = vst.msk [vmem:[#allocation0] sm:$0x1] %vm33, %v32
    %s35 = scalar_lea.vmem %s0, 10
    %v36 = vld [vmem:[%s35] sm:$0x1]
    %37 = vrot.lane.b32.xlu0 %v36, 80
    %v38 = vpop.permute.xlu0 %37
    %vm39 = vcmask 720512
    %40 = vst.msk [vmem:[#allocation0] sm:$0x1] %vm39, %v38
    %s41 = scalar_lea.vmem %s0, 9
    %v42 = vld [vmem:[%s41] sm:$0x1]
    %43 = vrot.lane.b32.xlu0 %v42, 72
    %v44 = vpop.permute.xlu0 %43
    %vm45 = vcmask 654912
    %46 = vst.msk [vmem:[#allocation0] sm:$0x1] %vm45, %v44
    %s47 = scalar_lea.vmem %s0, 8
    %v48 = vld [vmem:[%s47] sm:$0x1]
    %49 = vrot.lane.b32.xlu0 %v48, 64
    %v50 = vpop.permute.xlu0 %49
    %vm51 = vcmask 589312
    %52 = vst.msk [vmem:[#allocation0] sm:$0x1] %vm51, %v50
    %s53 = scalar_lea.vmem %s0, 7
    %v54 = vld [vmem:[%s53] sm:$0x1]
    %55 = vrot.lane.b32.xlu0 %v54, 56
    %v56 = vpop.permute.xlu0 %55
    %vm57 = vcmask 523712
    %58 = vst.msk [vmem:[#allocation0] sm:$0x1] %vm57, %v56
    %s59 = scalar_lea.vmem %s0, 6
    %v60 = vld [vmem:[%s59] sm:$0x1]
    %61 = vrot.lane.b32.xlu0 %v60, 48
    %v62 = vpop.permute.xlu0 %61
    %vm63 = vcmask 458112
    %64 = vst.msk [vmem:[#allocation0] sm:$0x1] %vm63, %v62
    %s65 = scalar_lea.vmem %s0, 5
    %v66 = vld [vmem:[%s65] sm:$0x1]
    %67 = vrot.lane.b32.xlu0 %v66, 40
    %v68 = vpop.permute.xlu0 %67
    %vm69 = vcmask 392512
    %70 = vst.msk [vmem:[#allocation0] sm:$0x1] %vm69, %v68
    %s71 = scalar_lea.vmem %s0, 4
    %v72 = vld [vmem:[%s71] sm:$0x1]
    %73 = vrot.lane.b32.xlu0 %v72, 32
    %v74 = vpop.permute.xlu0 %73
    %vm75 = vcmask 326912
    %76 = vst.msk [vmem:[#allocation0] sm:$0x1] %vm75, %v74
    %s77 = scalar_lea.vmem %s0, 3
    %v78 = vld [vmem:[%s77] sm:$0x1]
    %79 = vrot.lane.b32.xlu0 %v78, 24
    %v80 = vpop.permute.xlu0 %79
    %vm81 = vcmask 261312
    %82 = vst.msk [vmem:[#allocation0] sm:$0x1] %vm81, %v80
    %s83 = scalar_lea.vmem %s0, 2
    %v84 = vld [vmem:[%s83] sm:$0x1]
    %85 = vrot.lane.b32.xlu0 %v84, 16
    %v86 = vpop.permute.xlu0 %85
    %vm87 = vcmask 195712
    %88 = vst.msk [vmem:[#allocation0] sm:$0x1] %vm87, %v86
    %s89 = scalar_lea.vmem %s0, 1
    %v90 = vld [vmem:[%s89] sm:$0x1]
    %91 = vrot.lane.b32.xlu0 %v90, 8
    %v92 = vpop.permute.xlu0 %91
    %vm93 = vcmask 130112
    %94 = vst.msk [vmem:[#allocation0] sm:$0x1] %vm93, %v92
    %s96 = ssub.s32 2, 1
    %v97 = vld [vmem:[#allocation0] sm:%s96]
    %s99 = ssub.s32 2, 1
    %100 = vst [vmem:[%s1] sm:%s99] %v97

// kernel: resblock_forward.1
$region0: #{resblock_forward.1}
  #allocation0 [shape = 'u32[]', space=smem, size = 0x4, offset = 0x4, fixed_abs, tag = 'smem constant byte address 0x4 - core index']
  #allocation1 [shape = 'u32[72,128]{1,0:T(1,128)}', space=vmem, size = 0x9000, scoped, tag = 'internal scratch']
  #allocation2 [shape = 'f32[18,128]{1,0:T(8,128)}', space=vmem, size = 0x3000, scoped, tag = 'scratch operand']
  #allocation3 [shape = 'f32[18,128]{1,0:T(8,128)}', space=vmem, size = 0x3000, scoped, tag = 'scratch operand']
  %s0 = inlined_call_operand.vmem [shape: f32[2,16,128], index: 0, kind: input, shape index: {}]
  %s1 = inlined_call_operand.vmem [shape: bf16[3,128,128], index: 1, kind: input, shape index: {}]
  %s2 = inlined_call_operand.vmem [shape: f32[1,128], index: 2, kind: input, shape index: {}]
  %s3 = inlined_call_operand.vmem [shape: bf16[3,128,128], index: 3, kind: input, shape index: {}]
  %s4 = inlined_call_operand.vmem [shape: f32[1,128], index: 4, kind: input, shape index: {}]
  %s5 = inlined_call_operand.vmem [shape: f32[2,16,128], index: 5, kind: output, shape index: {}]
  %s6 = sld [smem:[#allocation0]]
  $region53: #{resblock_forward.1} parent=0
    _
  %s8 = ssub.s32 1, %s6
  %s9 = scalar_select 0, %s8, %s6
  loop: start=0, step=1, limit=4
  $region2: #{resblock_forward.1} parent=0 // loop_pre_header
    _
  $region3: #{resblock_forward.1} parent=0 // loop_header
    %s11 = sphi 0, %s15
    %p12 = scmp.ge.s32.totalorder %s11, 4
    %s21 = sphi 0, %s23
    %s24 = sphi 0, %s21
    %s25 = sphi 0, %s24
    %s41 = sphi 0, %s25
    %s45 = sphi 0, %s45
    %s47 = sphi 0, %s45
    %s48 = sphi 0, %s47
    %s62 = sphi 0, %s48
    %s66 = sphi 0, %s66
    %s68 = sphi 0, %s66
    %s69 = sphi 0, %s68
    %s83 = sphi 0, %s69
    %s87 = sphi 0, %s87
    %s89 = sphi 0, %s87
    %s90 = sphi 0, %s89
    %s104 = sphi 0, %s90
    %s108 = sphi 0, %s108
    %s110 = sphi 0, %s108
    %s111 = sphi 0, %s110
    %s125 = sphi 0, %s111
    %s131 = sphi 0, %s133
    %s134 = sphi 0, %s131
    %s135 = sphi 0, %s134
    %s151 = sphi 0, %s135
  $region4: #{resblock_forward.1} parent=0 // loop_header_branch
    %14 = sbr.rel (%p12) target = $region8
  $region5: #{resblock_forward.1} parent=0 // loop_body
    %s16 = ssub.s32 %s11, 1
    %s17 = ssub.s32 %s11, 2
    %s18 = sadd.s32 %s11, 1
    %s19 = ssub.s32 %s11, %s18
    %p20 = scmp.eq.s32.totalorder %s19, 0
    %s22 = sadd.s32 %s21, 1
    %s23 = scalar_select %p20, %s21, %s22
    %p26 = pneg %p20
    %p27 = scmp.eq.s32.totalorder %s11, 1
    %p28 = por %p26, %p27
    %p29 = scmp.ne.s32.totalorder %s21, %s24
    %p30 = scmp.eq.s32.totalorder %s11, 0
    %p31 = por %p29, %p30
    %p32 = scmp.ne.s32.totalorder %s21, %s24
    %p33 = scmp.eq.s32.totalorder %s16, 1
    %p34 = por %p32, %p33
    %p35 = scmp.ne.s32.totalorder %s24, %s25
    %p36 = scmp.eq.s32.totalorder %s16, 0
    %p37 = por %p35, %p36
    %p38 = scmp.ne.s32.totalorder %s24, %s25
    %p39 = scmp.eq.s32.totalorder %s17, 1
    %p40 = por %p38, %p39
    %p42 = scmp.ne.s32.totalorder %s25, %s41
    %p43 = scmp.eq.s32.totalorder %s17, 0
    %p44 = por %p42, %p43
    %s46 = sadd.s32 %s45, 1
    %p49 = scmp.eq.s32.totalorder %s11, 1
    %p50 = scmp.ne.s32.totalorder %s45, %s47
    %p51 = scmp.eq.s32.totalorder %s11, 0
    %p52 = por %p50, %p51
    %p53 = scmp.ne.s32.totalorder %s45, %s47
    %p54 = scmp.eq.s32.totalorder %s16, 1
    %p55 = por %p53, %p54
    %p56 = scmp.ne.s32.totalorder %s47, %s48
    %p57 = scmp.eq.s32.totalorder %s16, 0
    %p58 = por %p56, %p57
    %p59 = scmp.ne.s32.totalorder %s47, %s48
    %p60 = scmp.eq.s32.totalorder %s17, 1
    %p61 = por %p59, %p60
    %p63 = scmp.ne.s32.totalorder %s48, %s62
    %p64 = scmp.eq.s32.totalorder %s17, 0
    %p65 = por %p63, %p64
    %s67 = sadd.s32 %s66, 1
    %p70 = scmp.eq.s32.totalorder %s11, 1
    %p71 = scmp.ne.s32.totalorder %s66, %s68
    %p72 = scmp.eq.s32.totalorder %s11, 0
    %p73 = por %p71, %p72
    %p74 = scmp.ne.s32.totalorder %s66, %s68
    %p75 = scmp.eq.s32.totalorder %s16, 1
    %p76 = por %p74, %p75
    %p77 = scmp.ne.s32.totalorder %s68, %s69
    %p78 = scmp.eq.s32.totalorder %s16, 0
    %p79 = por %p77, %p78
    %p80 = scmp.ne.s32.totalorder %s68, %s69
    %p81 = scmp.eq.s32.totalorder %s17, 1
    %p82 = por %p80, %p81
    %p84 = scmp.ne.s32.totalorder %s69, %s83
    %p85 = scmp.eq.s32.totalorder %s17, 0
    %p86 = por %p84, %p85
    %s88 = sadd.s32 %s87, 1
    %p91 = scmp.eq.s32.totalorder %s11, 1
    %p92 = scmp.ne.s32.totalorder %s87, %s89
    %p93 = scmp.eq.s32.totalorder %s11, 0
    %p94 = por %p92, %p93
    %p95 = scmp.ne.s32.totalorder %s87, %s89
    %p96 = scmp.eq.s32.totalorder %s16, 1
    %p97 = por %p95, %p96
    %p98 = scmp.ne.s32.totalorder %s89, %s90
    %p99 = scmp.eq.s32.totalorder %s16, 0
    %p100 = por %p98, %p99
    %p101 = scmp.ne.s32.totalorder %s89, %s90
    %p102 = scmp.eq.s32.totalorder %s17, 1
    %p103 = por %p101, %p102
    %p105 = scmp.ne.s32.totalorder %s90, %s104
    %p106 = scmp.eq.s32.totalorder %s17, 0
    %p107 = por %p105, %p106
    %s109 = sadd.s32 %s108, 1
    %p112 = scmp.eq.s32.totalorder %s11, 1
    %p113 = scmp.ne.s32.totalorder %s108, %s110
    %p114 = scmp.eq.s32.totalorder %s11, 0
    %p115 = por %p113, %p114
    %p116 = scmp.ne.s32.totalorder %s108, %s110
    %p117 = scmp.eq.s32.totalorder %s16, 1
    %p118 = por %p116, %p117
    %p119 = scmp.ne.s32.totalorder %s110, %s111
    %p120 = scmp.eq.s32.totalorder %s16, 0
    %p121 = por %p119, %p120
    %p122 = scmp.ne.s32.totalorder %s110, %s111
    %p123 = scmp.eq.s32.totalorder %s17, 1
    %p124 = por %p122, %p123
    %p126 = scmp.ne.s32.totalorder %s111, %s125
    %p127 = scmp.eq.s32.totalorder %s17, 0
    %p128 = por %p126, %p127
    %s129 = ssub.s32 %s11, %s18
    %p130 = scmp.eq.s32.totalorder %s129, 0
    %s132 = sadd.s32 %s131, 1
    %s133 = scalar_select %p130, %s131, %s132
    %p136 = pneg %p130
    %p137 = scmp.eq.s32.totalorder %s11, 1
    %p138 = por %p136, %p137
    %p139 = scmp.ne.s32.totalorder %s131, %s134
    %p140 = scmp.eq.s32.totalorder %s11, 0
    %p141 = por %p139, %p140
    %p142 = scmp.ne.s32.totalorder %s131, %s134
    %p143 = scmp.eq.s32.totalorder %s16, 1
    %p144 = por %p142, %p143
    %p145 = scmp.ne.s32.totalorder %s134, %s135
    %p146 = scmp.eq.s32.totalorder %s16, 0
    %p147 = por %p145, %p146
    %p148 = scmp.ne.s32.totalorder %s134, %s135
    %p149 = scmp.eq.s32.totalorder %s17, 1
    %p150 = por %p148, %p149
    %p152 = scmp.ne.s32.totalorder %s135, %s151
    %p153 = scmp.eq.s32.totalorder %s17, 0
    %p154 = por %p152, %p153
    %p155 = scmp.le.s32.totalorder 1, %s11
    %p156 = scmp.lt.s32.totalorder %s11, 3
    %p157 = pnand %p155, %p156
    %p158 = pneg %p157
    // Predicated region
    $region9: #{resblock_forward.1} parent=5 // pred_check
      _
    $region10: #{resblock_forward.1} parent=5 // pred_check_branch
      %160 = sbr.rel (%p157) target = $region12
    $region11: #{resblock_forward.1} parent=5 // pred_region
      %s161 = ssub.s32 %s11, 1
      // Predicated region
      $region13: #{resblock_forward.1} parent=11 // pred_check
        %p162 = pneg %p58
      $region14: #{resblock_forward.1} parent=11 // pred_check_branch
        %164 = sbr.rel (%p162) target = $region16
      $region15: #{resblock_forward.1} parent=11 // pred_region
        _
      $region16: #{resblock_forward.1} parent=11 // pred_fallthru
        _
      // Predicated region
      $region17: #{resblock_forward.1} parent=11 // pred_check
        %p165 = pneg %p79
      $region18: #{resblock_forward.1} parent=11 // pred_check_branch
        %167 = sbr.rel (%p165) target = $region20
      $region19: #{resblock_forward.1} parent=11 // pred_region
        _
      $region20: #{resblock_forward.1} parent=11 // pred_fallthru
        _
      // Predicated region
      $region21: #{resblock_forward.1} parent=11 // pred_check
        %p168 = pneg %p100
      $region22: #{resblock_forward.1} parent=11 // pred_check_branch
        %170 = sbr.rel (%p168) target = $region24
      $region23: #{resblock_forward.1} parent=11 // pred_region
        _
      $region24: #{resblock_forward.1} parent=11 // pred_fallthru
        _
      // Predicated region
      $region25: #{resblock_forward.1} parent=11 // pred_check
        %p171 = pneg %p121
      $region26: #{resblock_forward.1} parent=11 // pred_check_branch
        %173 = sbr.rel (%p171) target = $region28
      $region27: #{resblock_forward.1} parent=11 // pred_region
        _
      $region28: #{resblock_forward.1} parent=11 // pred_fallthru
        _
    $region12: #{resblock_forward.1} parent=5 // pred_fallthru
      _
    %p174 = scmp.lt.s32.totalorder %s11, 2
    // Predicated region
    $region29: #{resblock_forward.1} parent=5 // pred_check
      %p175 = pneg %p174
    $region30: #{resblock_forward.1} parent=5 // pred_check_branch
      %177 = sbr.rel (%p175) target = $region32
    $region31: #{resblock_forward.1} parent=5 // pred_region
      // Predicated region
      $region33: #{resblock_forward.1} parent=31 // pred_check
        %p178 = pneg %p31
      $region34: #{resblock_forward.1} parent=31 // pred_check_branch
        %180 = sbr.rel (%p178) target = $region36
      $region35: #{resblock_forward.1} parent=31 // pred_region
        %p181 = scmp.lt.s32.totalorder %s11, 1
        %s182 = scalar_select %p181, %s11, 1
        %s183 = smul.addr %s182, 2
        %s184 = smul.addr %s183, 8
        %s185 = scalar_lea.vmem %s0, %s184
      $region36: #{resblock_forward.1} parent=31 // pred_fallthru
        _
    $region32: #{resblock_forward.1} parent=5 // pred_fallthru
      _
    %p186 = scmp.le.s32.totalorder 1, %s11
    %p187 = scmp.lt.s32.totalorder %s11, 3
    %p188 = pnand %p186, %p187
    %p189 = pneg %p188
    // Predicated region
    $region37: #{resblock_forward.1} parent=5 // pred_check
      _
    $region38: #{resblock_forward.1} parent=5 // pred_check_branch
      %191 = sbr.rel (%p188) target = $region40
    $region39: #{resblock_forward.1} parent=5 // pred_region
      %s192 = ssub.s32 %s11, 1
      %p193 = scmp.lt.s32.totalorder %s16, 1
      %s194 = scalar_select %p193, %s16, 1
      %s195 = smul.addr %s194, 2
      %s196 = smul.addr %s195, 8
      %s197 = scalar_lea.vmem %s0, %s196
      %p198 = pneg %p37
      %p199 = pneg %p34
      %p200 = pneg %p58
      %p201 = pneg %p55
      %p202 = pneg %p79
      %p203 = pneg %p76
      %p204 = pneg %p100
      %p205 = pneg %p97
      %p206 = pneg %p121
      %p207 = pneg %p118
      %p208 = pneg %p147
      %p209 = pneg %p144
      %p210 = scmp.lt.s32.totalorder %s16, 1
      %s211 = scalar_select %p210, %s16, 1
      %s212 = smul.addr %s211, 2
      %s213 = smul.addr %s212, 8
      %s214 = scalar_lea.vmem %s5, %s213
      %p215 = scmp.lt.s32.totalorder %s16, 1
      %s216 = scalar_select %p215, %s16, 1
      %s217 = smul.addr %s216, 2
      %s218 = smul.addr %s217, 8
      %s219 = scalar_lea.vmem %s0, %s218
      %p220 = scmp.lt.s32.totalorder %s16, 1
      %s221 = scalar_select %p220, %s16, 1
      %s222 = smul.addr %s221, 2
      %s223 = smul.addr %s222, 8
      %s224 = scalar_lea.vmem %s5, %s223
      %v225 = vld [vmem:[%s219] sm:$0xff]
      %v226 = vld [vmem:[%s219 + $0x8] sm:$0xff]
      %227 = vst [vmem:[#allocation2] sm:$0x1] 0.0
      %228 = vst [vmem:[#allocation2 + $0x11] sm:$0x1] 0.0
      %229 = vst [vmem:[#allocation2 + $0x1] sm:$0xff] %v225
      %230 = vst [vmem:[#allocation2 + $0x9] sm:$0xff] %v226
      %v231 = vld [vmem:[#allocation2] sm:$0xff]
      %v232 = vld [vmem:[#allocation2 + $0x8] sm:$0xff]
      %v233 = vpack.c.bf16 %v232, %v231
      %v234 = vld [vmem:[%s1] sm:$0xf]
      %v235 = vld [vmem:[%s1 + $0x4] sm:$0xf]
      %v236 = vld [vmem:[%s1 + $0x8] sm:$0xf]
      %v237 = vld [vmem:[%s1 + $0xc] sm:$0xf]
      %v238 = vld [vmem:[%s1 + $0x10] sm:$0xf]
      %v239 = vld [vmem:[%s1 + $0x14] sm:$0xf]
      %v240 = vld [vmem:[%s1 + $0x18] sm:$0xf]
      %v241 = vld [vmem:[%s1 + $0x1c] sm:$0xf]
      %v242 = vld [vmem:[%s1 + $0x20] sm:$0xf]
      %v243 = vld [vmem:[%s1 + $0x24] sm:$0xf]
      %v244 = vld [vmem:[%s1 + $0x28] sm:$0xf]
      %v245 = vld [vmem:[%s1 + $0x2c] sm:$0xf]
      %v246 = vld [vmem:[%s1 + $0x30] sm:$0xf]
      %v247 = vld [vmem:[%s1 + $0x34] sm:$0xf]
      %v248 = vld [vmem:[%s1 + $0x38] sm:$0xf]
      %v249 = vld [vmem:[%s1 + $0x3c] sm:$0xf]
      %v250 = vld [vmem:[#allocation2 + $0x1] sm:$0xff]
      %v251 = vld [vmem:[#allocation2 + $0x9] sm:$0xff]
      %v252 = vpack.c.bf16 %v251, %v250
      %s253 = scalar_lea.vmem %s1, 64
      %v254 = vld [vmem:[%s253] sm:$0xf]
      %v255 = vld [vmem:[%s253 + $0x4] sm:$0xf]
      %v256 = vld [vmem:[%s253 + $0x8] sm:$0xf]
      %v257 = vld [vmem:[%s253 + $0xc] sm:$0xf]
      %v258 = vld [vmem:[%s253 + $0x10] sm:$0xf]
      %v259 = vld [vmem:[%s253 + $0x14] sm:$0xf]
      %v260 = vld [vmem:[%s253 + $0x18] sm:$0xf]
      %v261 = vld [vmem:[%s253 + $0x1c] sm:$0xf]
      %v262 = vld [vmem:[%s253 + $0x20] sm:$0xf]
      %v263 = vld [vmem:[%s253 + $0x24] sm:$0xf]
      %v264 = vld [vmem:[%s253 + $0x28] sm:$0xf]
      %v265 = vld [vmem:[%s253 + $0x2c] sm:$0xf]
      %v266 = vld [vmem:[%s253 + $0x30] sm:$0xf]
      %v267 = vld [vmem:[%s253 + $0x34] sm:$0xf]
      %v268 = vld [vmem:[%s253 + $0x38] sm:$0xf]
      %v269 = vld [vmem:[%s253 + $0x3c] sm:$0xf]
      %v286 = vunpack.c.l.b16 %v254
      %v287 = vunpack.c.l.b16 %v255
      %v288 = vunpack.c.l.b16 %v256
      %v289 = vunpack.c.l.b16 %v257
      %v290 = vunpack.c.l.b16 %v258
      %v291 = vunpack.c.l.b16 %v259
      %v292 = vunpack.c.l.b16 %v260
      %v293 = vunpack.c.l.b16 %v261
      %v294 = vunpack.c.l.b16 %v262
      %v295 = vunpack.c.l.b16 %v263
      %v296 = vunpack.c.l.b16 %v264
      %v297 = vunpack.c.l.b16 %v265
      %v298 = vunpack.c.l.b16 %v266
      %v299 = vunpack.c.l.b16 %v267
      %v300 = vunpack.c.l.b16 %v268
      %v301 = vunpack.c.l.b16 %v269
      %v302 = vpack.c.b16 %v287, %v286
      %v303 = vpack.c.b16 %v289, %v288
      %v304 = vpack.c.b16 %v291, %v290
      %v305 = vpack.c.b16 %v293, %v292
      %v306 = vpack.c.b16 %v295, %v294
      %v307 = vpack.c.b16 %v297, %v296
      %v308 = vpack.c.b16 %v299, %v298
      %v309 = vpack.c.b16 %v301, %v300
      %318 = vmatpush.bf16.msra.mxu0 %v309
      %319 = vmatpush.bf16.msra.mxu0 %v308
      %320 = vmatpush.bf16.msra.mxu0 %v307
      %321 = vmatpush.bf16.msra.mxu0 %v306
      %322 = vmatpush.bf16.msra.mxu0 %v305
      %323 = vmatpush.bf16.msra.mxu0 %v304
      %324 = vmatpush.bf16.msra.mxu0 %v303
      %325 = vmatpush.bf16.msra.mxu0 %v302
      %326 = vmatmul.bf16.gmra.mxu0 %v252
      %v327 = vpop.f32.mrf.mxu0
      %v328 = vadd.f32 0.0, %v327
      %v329 = vpop.f32.mrf.mxu0
      %v330 = vadd.f32 0.0, %v329
      %331 = vdwg.mxu0
      %v348 = vunpack.c.l.b16 %v234
      %v349 = vunpack.c.l.b16 %v235
      %v350 = vunpack.c.l.b16 %v236
      %v351 = vunpack.c.l.b16 %v237
      %v352 = vunpack.c.l.b16 %v238
      %v353 = vunpack.c.l.b16 %v239
      %v354 = vunpack.c.l.b16 %v240
      %v355 = vunpack.c.l.b16 %v241
      %v356 = vunpack.c.l.b16 %v242
      %v357 = vunpack.c.l.b16 %v243
      %v358 = vunpack.c.l.b16 %v244
      %v359 = vunpack.c.l.b16 %v245
      %v360 = vunpack.c.l.b16 %v246
      %v361 = vunpack.c.l.b16 %v247
      %v362 = vunpack.c.l.b16 %v248
      %v363 = vunpack.c.l.b16 %v249
      %v364 = vpack.c.b16 %v349, %v348
      %v365 = vpack.c.b16 %v351, %v350
      %v366 = vpack.c.b16 %v353, %v352
      %v367 = vpack.c.b16 %v355, %v354
      %v368 = vpack.c.b16 %v357, %v356
      %v369 = vpack.c.b16 %v359, %v358
      %v370 = vpack.c.b16 %v361, %v360
      %v371 = vpack.c.b16 %v363, %v362
      %380 = vmatpush.bf16.msra.mxu0 %v371
      %381 = vmatpush.bf16.msra.mxu0 %v370
      %382 = vmatpush.bf16.msra.mxu0 %v369
      %383 = vmatpush.bf16.msra.mxu0 %v368
      %384 = vmatpush.bf16.msra.mxu0 %v367
      %385 = vmatpush.bf16.msra.mxu0 %v366
      %386 = vmatpush.bf16.msra.mxu0 %v365
      %387 = vmatpush.bf16.msra.mxu0 %v364
      %388 = vmatmul.bf16.gmra.mxu0 %v233
      %v389 = vpop.f32.mrf.mxu0
      %v390 = vadd.f32 %v328, %v389
      %v391 = vpop.f32.mrf.mxu0
      %v392 = vadd.f32 %v330, %v391
      %393 = vdwg.mxu0
      %v394 = vld [vmem:[#allocation2 + $0x2] sm:$0xff]
      %v395 = vld [vmem:[#allocation2 + $0xa] sm:$0xff]
      %v396 = vpack.c.bf16 %v395, %v394
      %s397 = scalar_lea.vmem %s1, 128
      %v398 = vld [vmem:[%s397] sm:$0xf]
      %v399 = vld [vmem:[%s397 + $0x4] sm:$0xf]
      %v400 = vld [vmem:[%s397 + $0x8] sm:$0xf]
      %v401 = vld [vmem:[%s397 + $0xc] sm:$0xf]
      %v402 = vld [vmem:[%s397 + $0x10] sm:$0xf]
      %v403 = vld [vmem:[%s397 + $0x14] sm:$0xf]
      %v404 = vld [vmem:[%s397 + $0x18] sm:$0xf]
      %v405 = vld [vmem:[%s397 + $0x1c] sm:$0xf]
      %v406 = vld [vmem:[%s397 + $0x20] sm:$0xf]
      %v407 = vld [vmem:[%s397 + $0x24] sm:$0xf]
      %v408 = vld [vmem:[%s397 + $0x28] sm:$0xf]
      %v409 = vld [vmem:[%s397 + $0x2c] sm:$0xf]
      %v410 = vld [vmem:[%s397 + $0x30] sm:$0xf]
      %v411 = vld [vmem:[%s397 + $0x34] sm:$0xf]
      %v412 = vld [vmem:[%s397 + $0x38] sm:$0xf]
      %v413 = vld [vmem:[%s397 + $0x3c] sm:$0xf]
      %v430 = vunpack.c.l.b16 %v398
      %v431 = vunpack.c.l.b16 %v399
      %v432 = vunpack.c.l.b16 %v400
      %v433 = vunpack.c.l.b16 %v401
      %v434 = vunpack.c.l.b16 %v402
      %v435 = vunpack.c.l.b16 %v403
      %v436 = vunpack.c.l.b16 %v404
      %v437 = vunpack.c.l.b16 %v405
      %v438 = vunpack.c.l.b16 %v406
      %v439 = vunpack.c.l.b16 %v407
      %v440 = vunpack.c.l.b16 %v408
      %v441 = vunpack.c.l.b16 %v409
      %v442 = vunpack.c.l.b16 %v410
      %v443 = vunpack.c.l.b16 %v411
      %v444 = vunpack.c.l.b16 %v412
      %v445 = vunpack.c.l.b16 %v413
      %v446 = vpack.c.b16 %v431, %v430
      %v447 = vpack.c.b16 %v433, %v432
      %v448 = vpack.c.b16 %v435, %v434
      %v449 = vpack.c.b16 %v437, %v436
      %v450 = vpack.c.b16 %v439, %v438
      %v451 = vpack.c.b16 %v441, %v440
      %v452 = vpack.c.b16 %v443, %v442
      %v453 = vpack.c.b16 %v445, %v444
      %462 = vmatpush.bf16.msra.mxu0 %v453
      %463 = vmatpush.bf16.msra.mxu0 %v452
      %464 = vmatpush.bf16.msra.mxu0 %v451
      %465 = vmatpush.bf16.msra.mxu0 %v450
      %466 = vmatpush.bf16.msra.mxu0 %v449
      %467 = vmatpush.bf16.msra.mxu0 %v448
      %468 = vmatpush.bf16.msra.mxu0 %v447
      %469 = vmatpush.bf16.msra.mxu0 %v446
      %470 = vmatmul.bf16.gmra.mxu0 %v396
      %v471 = vpop.f32.mrf.mxu0
      %v472 = vadd.f32 0.0, %v471
      %v473 = vpop.f32.mrf.mxu0
      %v474 = vadd.f32 0.0, %v473
      %475 = vdwg.mxu0
      %v476 = vadd.f32 %v390, %v472
      %v477 = vadd.f32 %v392, %v474
      %v478 = vld [vmem:[%s2] sm:$0x1]
      %v480 = vperm.slane %v478, 0
      %v482 = vadd.f32 %v476, %v480
      %v483 = vadd.f32 %v477, %v480
      %v484 = vmax.f32 %v482, 0.0
      %v485 = vmax.f32 %v483, 0.0
      %486 = vst [vmem:[#allocation3] sm:$0x1] 0.0
      %487 = vst [vmem:[#allocation3 + $0x11] sm:$0x1] 0.0
      %488 = vst [vmem:[#allocation3 + $0x1] sm:$0xff] %v484
      %489 = vst [vmem:[#allocation3 + $0x9] sm:$0xff] %v485
      %v490 = vld [vmem:[#allocation3] sm:$0xff]
      %v491 = vld [vmem:[#allocation3 + $0x8] sm:$0xff]
      %v492 = vpack.c.bf16 %v491, %v490
      %v493 = vld [vmem:[%s3] sm:$0xf]
      %v494 = vld [vmem:[%s3 + $0x4] sm:$0xf]
      %v495 = vld [vmem:[%s3 + $0x8] sm:$0xf]
      %v496 = vld [vmem:[%s3 + $0xc] sm:$0xf]
      %v497 = vld [vmem:[%s3 + $0x10] sm:$0xf]
      %v498 = vld [vmem:[%s3 + $0x14] sm:$0xf]
      %v499 = vld [vmem:[%s3 + $0x18] sm:$0xf]
      %v500 = vld [vmem:[%s3 + $0x1c] sm:$0xf]
      %v501 = vld [vmem:[%s3 + $0x20] sm:$0xf]
      %v502 = vld [vmem:[%s3 + $0x24] sm:$0xf]
      %v503 = vld [vmem:[%s3 + $0x28] sm:$0xf]
      %v504 = vld [vmem:[%s3 + $0x2c] sm:$0xf]
      %v505 = vld [vmem:[%s3 + $0x30] sm:$0xf]
      %v506 = vld [vmem:[%s3 + $0x34] sm:$0xf]
      %v507 = vld [vmem:[%s3 + $0x38] sm:$0xf]
      %v508 = vld [vmem:[%s3 + $0x3c] sm:$0xf]
      %v509 = vld [vmem:[#allocation3 + $0x1] sm:$0xff]
      %v510 = vld [vmem:[#allocation3 + $0x9] sm:$0xff]
      %v511 = vpack.c.bf16 %v510, %v509
      %s512 = scalar_lea.vmem %s3, 64
      %v513 = vld [vmem:[%s512] sm:$0xf]
      %v514 = vld [vmem:[%s512 + $0x4] sm:$0xf]
      %v515 = vld [vmem:[%s512 + $0x8] sm:$0xf]
      %v516 = vld [vmem:[%s512 + $0xc] sm:$0xf]
      %v517 = vld [vmem:[%s512 + $0x10] sm:$0xf]
      %v518 = vld [vmem:[%s512 + $0x14] sm:$0xf]
      %v519 = vld [vmem:[%s512 + $0x18] sm:$0xf]
      %v520 = vld [vmem:[%s512 + $0x1c] sm:$0xf]
      %v521 = vld [vmem:[%s512 + $0x20] sm:$0xf]
      %v522 = vld [vmem:[%s512 + $0x24] sm:$0xf]
      %v523 = vld [vmem:[%s512 + $0x28] sm:$0xf]
      %v524 = vld [vmem:[%s512 + $0x2c] sm:$0xf]
      %v525 = vld [vmem:[%s512 + $0x30] sm:$0xf]
      %v526 = vld [vmem:[%s512 + $0x34] sm:$0xf]
      %v527 = vld [vmem:[%s512 + $0x38] sm:$0xf]
      %v528 = vld [vmem:[%s512 + $0x3c] sm:$0xf]
      %v545 = vunpack.c.l.b16 %v513
      %v546 = vunpack.c.l.b16 %v514
      %v547 = vunpack.c.l.b16 %v515
      %v548 = vunpack.c.l.b16 %v516
      %v549 = vunpack.c.l.b16 %v517
      %v550 = vunpack.c.l.b16 %v518
      %v551 = vunpack.c.l.b16 %v519
      %v552 = vunpack.c.l.b16 %v520
      %v553 = vunpack.c.l.b16 %v521
      %v554 = vunpack.c.l.b16 %v522
      %v555 = vunpack.c.l.b16 %v523
      %v556 = vunpack.c.l.b16 %v524
      %v557 = vunpack.c.l.b16 %v525
      %v558 = vunpack.c.l.b16 %v526
      %v559 = vunpack.c.l.b16 %v527
      %v560 = vunpack.c.l.b16 %v528
      %v561 = vpack.c.b16 %v546, %v545
      %v562 = vpack.c.b16 %v548, %v547
      %v563 = vpack.c.b16 %v550, %v549
      %v564 = vpack.c.b16 %v552, %v551
      %v565 = vpack.c.b16 %v554, %v553
      %v566 = vpack.c.b16 %v556, %v555
      %v567 = vpack.c.b16 %v558, %v557
      %v568 = vpack.c.b16 %v560, %v559
      %577 = vmatpush.bf16.msra.mxu0 %v568
      %578 = vmatpush.bf16.msra.mxu0 %v567
      %579 = vmatpush.bf16.msra.mxu0 %v566
      %580 = vmatpush.bf16.msra.mxu0 %v565
      %581 = vmatpush.bf16.msra.mxu0 %v564
      %582 = vmatpush.bf16.msra.mxu0 %v563
      %583 = vmatpush.bf16.msra.mxu0 %v562
      %584 = vmatpush.bf16.msra.mxu0 %v561
      %585 = vmatmul.bf16.gmra.mxu0 %v511
      %v586 = vpop.f32.mrf.mxu0
      %v587 = vadd.f32 0.0, %v586
      %v588 = vpop.f32.mrf.mxu0
      %v589 = vadd.f32 0.0, %v588
      %590 = vdwg.mxu0
      %v607 = vunpack.c.l.b16 %v493
      %v608 = vunpack.c.l.b16 %v494
      %v609 = vunpack.c.l.b16 %v495
      %v610 = vunpack.c.l.b16 %v496
      %v611 = vunpack.c.l.b16 %v497
      %v612 = vunpack.c.l.b16 %v498
      %v613 = vunpack.c.l.b16 %v499
      %v614 = vunpack.c.l.b16 %v500
      %v615 = vunpack.c.l.b16 %v501
      %v616 = vunpack.c.l.b16 %v502
      %v617 = vunpack.c.l.b16 %v503
      %v618 = vunpack.c.l.b16 %v504
      %v619 = vunpack.c.l.b16 %v505
      %v620 = vunpack.c.l.b16 %v506
      %v621 = vunpack.c.l.b16 %v507
      %v622 = vunpack.c.l.b16 %v508
      %v623 = vpack.c.b16 %v608, %v607
      %v624 = vpack.c.b16 %v610, %v609
      %v625 = vpack.c.b16 %v612, %v611
      %v626 = vpack.c.b16 %v614, %v613
      %v627 = vpack.c.b16 %v616, %v615
      %v628 = vpack.c.b16 %v618, %v617
      %v629 = vpack.c.b16 %v620, %v619
      %v630 = vpack.c.b16 %v622, %v621
      %639 = vmatpush.bf16.msra.mxu0 %v630
      %640 = vmatpush.bf16.msra.mxu0 %v629
      %641 = vmatpush.bf16.msra.mxu0 %v628
      %642 = vmatpush.bf16.msra.mxu0 %v627
      %643 = vmatpush.bf16.msra.mxu0 %v626
      %644 = vmatpush.bf16.msra.mxu0 %v625
      %645 = vmatpush.bf16.msra.mxu0 %v624
      %646 = vmatpush.bf16.msra.mxu0 %v623
      %647 = vmatmul.bf16.gmra.mxu0 %v492
      %v648 = vpop.f32.mrf.mxu0
      %v649 = vadd.f32 %v587, %v648
      %v650 = vpop.f32.mrf.mxu0
      %v651 = vadd.f32 %v589, %v650
      %652 = vdwg.mxu0
      %v653 = vld [vmem:[#allocation3 + $0x2] sm:$0xff]
      %v654 = vld [vmem:[#allocation3 + $0xa] sm:$0xff]
      %v655 = vpack.c.bf16 %v654, %v653
      %s656 = scalar_lea.vmem %s3, 128
      %v657 = vld [vmem:[%s656] sm:$0xf]
      %v658 = vld [vmem:[%s656 + $0x4] sm:$0xf]
      %v659 = vld [vmem:[%s656 + $0x8] sm:$0xf]
      %v660 = vld [vmem:[%s656 + $0xc] sm:$0xf]
      %v661 = vld [vmem:[%s656 + $0x10] sm:$0xf]
      %v662 = vld [vmem:[%s656 + $0x14] sm:$0xf]
      %v663 = vld [vmem:[%s656 + $0x18] sm:$0xf]
      %v664 = vld [vmem:[%s656 + $0x1c] sm:$0xf]
      %v665 = vld [vmem:[%s656 + $0x20] sm:$0xf]
      %v666 = vld [vmem:[%s656 + $0x24] sm:$0xf]
      %v667 = vld [vmem:[%s656 + $0x28] sm:$0xf]
      %v668 = vld [vmem:[%s656 + $0x2c] sm:$0xf]
      %v669 = vld [vmem:[%s656 + $0x30] sm:$0xf]
      %v670 = vld [vmem:[%s656 + $0x34] sm:$0xf]
      %v671 = vld [vmem:[%s656 + $0x38] sm:$0xf]
      %v672 = vld [vmem:[%s656 + $0x3c] sm:$0xf]
      %v689 = vunpack.c.l.b16 %v657
      %v690 = vunpack.c.l.b16 %v658
      %v691 = vunpack.c.l.b16 %v659
      %v692 = vunpack.c.l.b16 %v660
      %v693 = vunpack.c.l.b16 %v661
      %v694 = vunpack.c.l.b16 %v662
      %v695 = vunpack.c.l.b16 %v663
      %v696 = vunpack.c.l.b16 %v664
      %v697 = vunpack.c.l.b16 %v665
      %v698 = vunpack.c.l.b16 %v666
      %v699 = vunpack.c.l.b16 %v667
      %v700 = vunpack.c.l.b16 %v668
      %v701 = vunpack.c.l.b16 %v669
      %v702 = vunpack.c.l.b16 %v670
      %v703 = vunpack.c.l.b16 %v671
      %v704 = vunpack.c.l.b16 %v672
      %v705 = vpack.c.b16 %v690, %v689
      %v706 = vpack.c.b16 %v692, %v691
      %v707 = vpack.c.b16 %v694, %v693
      %v708 = vpack.c.b16 %v696, %v695
      %v709 = vpack.c.b16 %v698, %v697
      %v710 = vpack.c.b16 %v700, %v699
      %v711 = vpack.c.b16 %v702, %v701
      %v712 = vpack.c.b16 %v704, %v703
      %721 = vmatpush.bf16.msra.mxu0 %v712
      %722 = vmatpush.bf16.msra.mxu0 %v711
      %723 = vmatpush.bf16.msra.mxu0 %v710
      %724 = vmatpush.bf16.msra.mxu0 %v709
      %725 = vmatpush.bf16.msra.mxu0 %v708
      %726 = vmatpush.bf16.msra.mxu0 %v707
      %727 = vmatpush.bf16.msra.mxu0 %v706
      %728 = vmatpush.bf16.msra.mxu0 %v705
      %729 = vmatmul.bf16.gmra.mxu0 %v655
      %v730 = vpop.f32.mrf.mxu0
      %v731 = vadd.f32 0.0, %v730
      %v732 = vpop.f32.mrf.mxu0
      %v733 = vadd.f32 0.0, %v732
      %734 = vdwg.mxu0
      %v735 = vadd.f32 %v649, %v731
      %v736 = vadd.f32 %v651, %v733
      %v737 = vld [vmem:[%s4] sm:$0x1]
      %v739 = vperm.slane %v737, 0
      %v741 = vadd.f32 %v735, %v739
      %v742 = vadd.f32 %v736, %v739
      %v743 = vadd.f32 %v741, %v225
      %v744 = vadd.f32 %v742, %v226
      %745 = vst [vmem:[%s224] sm:$0xff] %v743
      %746 = vst [vmem:[%s224 + $0x8] sm:$0xff] %v744
      %p747 = scmp.lt.s32.totalorder %s16, 1
      %s748 = scalar_select %p747, %s16, 1
      %s749 = smul.addr %s748, 2
      %s750 = smul.addr %s749, 8
      %s751 = scalar_lea.vmem %s5, %s750
      // Predicated region
      $region41: #{resblock_forward.1} parent=39 // pred_check
        %p752 = pneg %p144
      $region42: #{resblock_forward.1} parent=39 // pred_check_branch
        %754 = sbr.rel (%p752) target = $region44
      $region43: #{resblock_forward.1} parent=39 // pred_region
        _
      $region44: #{resblock_forward.1} parent=39 // pred_fallthru
        _
    $region40: #{resblock_forward.1} parent=5 // pred_fallthru
      _
    %p755 = scmp.le.s32.totalorder 2, %s11
    // Predicated region
    $region45: #{resblock_forward.1} parent=5 // pred_check
      %p756 = pneg %p755
    $region46: #{resblock_forward.1} parent=5 // pred_check_branch
      %758 = sbr.rel (%p756) target = $region48
    $region47: #{resblock_forward.1} parent=5 // pred_region
      %s759 = ssub.s32 %s11, 2
      // Predicated region
      $region49: #{resblock_forward.1} parent=47 // pred_check
        %p760 = pneg %p150
      $region50: #{resblock_forward.1} parent=47 // pred_check_branch
        %762 = sbr.rel (%p760) target = $region52
      $region51: #{resblock_forward.1} parent=47 // pred_region
        %p763 = scmp.lt.s32.totalorder %s17, 1
        %s764 = scalar_select %p763, %s17, 1
        %s765 = smul.addr %s764, 2
        %s766 = smul.addr %s765, 8
        %s767 = scalar_lea.vmem %s5, %s766
      $region52: #{resblock_forward.1} parent=47 // pred_fallthru
        _
    $region48: #{resblock_forward.1} parent=5 // pred_fallthru
      _
  $region6: #{resblock_forward.1} parent=0 // loop_footer
    %s15 = sadd.s32 1, %s11
  $region7: #{resblock_forward.1} parent=0 // loop_footer_branch
    %10 = sbr.rel target = $region3
  $region8: #{resblock_forward.1} parent=0 // loop_exit
    _

</llo_original>
